<compile_context>
chip_gen: v7x
topology: tpu7x:2x2x1
jax: 0.10.0
libtpu: 0.0.40
codegen_flags: <defaults>
</compile_context>

<pallas_src>
import jax
import jax.numpy as jnp
from jax.experimental import pallas as pl
from jax.experimental.pallas import tpu as pltpu

# Module defaults (task_type='binary')
N_CHANNEL = 64        # conv out channels C
CLIENT_TREE_NUM = 10  # conv kernel size == stride  (K)
CLIENT_NUM = 2        # number of conv output positions (T)
N_OUT = 1             # binary head

# TODO(synk): only the default task_type='binary' branch is implemented; the
# 'multiclass'/'new_multiclass' branches (n_out > 1) of the PyTorch module are
# unused here.


def cnn_kernel(x_ref, w1_ref, b1_ref, w2_ref, bd_ref, o_ref):
    """x_ref:  [tile_b, L]  f32   activations (L = K*T, natural layout)
       w1_ref: [L, H]       bf16  block-diagonal conv weight (H = pad(T*C))
       b1_ref: [1, H]       f32   conv bias replicated per window
       w2_ref: [1, H]       f32   final Linear weight (flatten order absorbed)
       bd_ref: [1, 128]     f32   final Linear bias (broadcast)
       o_ref:  [tile_b//128, 128] f32  sigmoid(logits), batch packed along lanes."""
    G = o_ref.shape[0]          # tile_b // 128
    H = w1_ref.shape[1]
    # Conv1d over all T windows at once: one MXU matmul, f32 accumulation.
    h = jnp.dot(x_ref[...].astype(w1_ref.dtype), w1_ref[...],
                preferred_element_type=jnp.float32)          # [tile_b, H]
    h = jnp.maximum(h + b1_ref[...], 0.0)                    # bias + ReLU (2nd ReLU idempotent)
    # Final Linear (single real output column): VPU multiply + cross-lane
    # reduce, then pack the per-sample logits batch-along-lanes so the output
    # block is lane-dense (tiny HBM writeback, unmasked stores).
    prods = h * w2_ref[...]                                   # [tile_b, H] f32
    logits = jnp.sum(prods.reshape(G, 128, H), axis=-1)       # [G, 128]
    o_ref[...] = jax.nn.sigmoid(logits + bd_ref[...])


def init_params(key):
    """PyTorch-shaped params with PyTorch-equivalent init distributions."""
    C, K, T, N = N_CHANNEL, CLIENT_TREE_NUM, CLIENT_NUM, N_OUT
    k1, k2, k3, k4 = jax.random.split(key, 4)
    conv_bound = 1.0 / jnp.sqrt(jnp.float32(K))              # Conv1d default init
    wc = jax.random.uniform(k1, (C, 1, K), jnp.float32, -conv_bound, conv_bound)
    bc = jax.random.uniform(k2, (C,), jnp.float32, -conv_bound, conv_bound)
    fan_in = C * T
    kaiming = jnp.sqrt(jnp.float32(6.0 / fan_in))            # kaiming_uniform (relu)
    wd = jax.random.uniform(k3, (N, fan_in), jnp.float32, -kaiming, kaiming)
    lin_bound = 1.0 / jnp.sqrt(jnp.float32(fan_in))
    bd = jax.random.uniform(k4, (N,), jnp.float32, -lin_bound, lin_bound)
    return wc, bc, wd, bd


def _round_up(v, m):
    return ((v + m - 1) // m) * m


def _choose_tiles(B):
    """Large batch tiles (amortize ~0.35us/grid step), packed-output block
    stays a multiple of (8, 128) (or equals the full array), and B > 1024
    always yields >= 2 grid steps so v7x can split the batch across cores."""
    b_ceil = _round_up(max(B, 1), 128)
    if b_ceil <= 1024:
        tile_b = b_ceil                                   # single grid step
    else:
        tile_b = min(4096, max(1024, _round_up(-(-B // 8), 128)))
    return tile_b, _round_up(B, tile_b)


def cnn_forward(x, params, weight_dtype=jnp.bfloat16):
    wc_t, bc, wd, bd = params        # torch-shaped: [C,1,K], [C], [N,C*T], [N]
    B = x.shape[0]
    C, _, K = wc_t.shape
    T = x.shape[2] // K
    N = wd.shape[0]
    assert N == 1, "only the binary (single-output) head is implemented"
    L = T * K                        # conv-covered input length (stride == K)
    H = T * C                        # flattened hidden width
    H_pad = _round_up(H, 128)

    tile_b, B_pad = _choose_tiles(B)
    G = tile_b // 128

    # Activations stay [B, L] f32 — no transpose / dtype conversion pass.
    x2 = x.reshape(B, -1)
    if x2.shape[1] != L:
        x2 = x2[:, :L]               # conv drops any trailing remainder
    if B_pad != B:
        x2 = jnp.pad(x2, ((0, B_pad - B), (0, 0)))

    # Block-diagonal conv weight: w1[t*K + k, t*C + c] = wc[c, 0, k]
    wk = jnp.transpose(wc_t[:, 0, :], (1, 0))                 # [K, C]
    w1 = jnp.zeros((L, H), jnp.float32)
    for t in range(T):               # T is tiny & static (client_num)
        w1 = w1.at[t * K:(t + 1) * K, t * C:(t + 1) * C].set(wk)
    w1 = jnp.pad(w1, ((0, 0), (0, H_pad - H))).astype(weight_dtype)

    # Conv bias replicated per window: b1[0, t*C + c] = bc[c]
    b1 = jnp.pad(jnp.tile(bc, T)[None, :],
                 ((0, 0), (0, H_pad - H))).astype(jnp.float32)

    # Final Linear weight permuted so w2[0, t*C + c] == Wd[0, c*T + t]
    # (absorbs the PyTorch flatten(start_dim=1) ordering).
    w2 = jnp.transpose(wd.reshape(N, C, T), (0, 2, 1)).reshape(N, H)
    w2 = jnp.pad(w2, ((0, 0), (0, H_pad - H))).astype(jnp.float32)
    bdb = jnp.full((1, 128), bd[0], jnp.float32)

    grid = (B_pad // tile_b,)
    out = pl.pallas_call(
        cnn_kernel,
        out_shape=jax.ShapeDtypeStruct((B_pad // 128, 128), jnp.float32),
        grid_spec=pltpu.PrefetchScalarGridSpec(
            num_scalar_prefetch=0,
            grid=grid,
            in_specs=[
                pl.BlockSpec((tile_b, L), lambda i: (i, 0)),    # activations: batch-tiled
                pl.BlockSpec((L, H_pad), lambda i: (0, 0)),     # weights: resident in VMEM
                pl.BlockSpec((1, H_pad), lambda i: (0, 0)),
                pl.BlockSpec((1, H_pad), lambda i: (0, 0)),
                pl.BlockSpec((1, 128), lambda i: (0, 0)),
            ],
            out_specs=pl.BlockSpec((G, 128), lambda i: (i, 0)),  # packed, lane-dense
        ),
        compiler_params=pltpu.CompilerParams(
            dimension_semantics=("parallel",)),
    )(x2, w1, b1, w2, bdb)
    # Unpack batch-along-lanes layout: sample b lives at out[b // 128, b % 128].
    return out.reshape(-1)[:B].reshape(B, N)


def cnn_reference(x, params):
    """Pure-JAX f32 reference of the PyTorch forward (binary branch)."""
    wc, bc, wd, bd = params
    B = x.shape[0]
    C, _, K = wc.shape
    T = x.shape[2] // K
    xr = x.reshape(B, T, K)
    conv = jnp.einsum('btk,ck->bct', xr, wc[:, 0, :]) + bc[None, :, None]
    h = jnp.maximum(conv, 0.0)                 # ReLU(conv)
    flat = h.reshape(B, C * T)                 # flatten(start_dim=1)
    flat = jnp.maximum(flat, 0.0)              # second ReLU (idempotent)
    logits = flat @ wd.T + bd
    return jax.nn.sigmoid(logits)


if __name__ == "__main__":
    key = jax.random.PRNGKey(0)
    key, kx = jax.random.split(key)
    batch = 2
    x = jax.random.normal(
        kx, (batch, 1, CLIENT_TREE_NUM * CLIENT_NUM), jnp.float32)
    params = init_params(key)

    out = jax.block_until_ready(cnn_forward(x, params))
    ref = jax.block_until_ready(cnn_reference(x, params))

    assert out.shape == (batch, N_OUT)
    # bf16 conv weights/activations vs f32 reference -> loose-but-safe tolerance
    assert jnp.allclose(out, ref, atol=2e-2, rtol=0.0)
    print("KERNEL_OK")
</pallas_src>

<mosaic_0001>
module attributes {stable_mosaic.version = 11 : i64} {
  func.func @cnn_kernel(%arg0: i32, %arg1: memref<128x20xf32, #tpu.memory_space<vmem>>, %arg2: memref<20x128xbf16, #tpu.memory_space<vmem>>, %arg3: memref<1x128xf32, #tpu.memory_space<vmem>>, %arg4: memref<1x128xf32, #tpu.memory_space<vmem>>, %arg5: memref<1x128xf32, #tpu.memory_space<vmem>>, %arg6: memref<1x128xf32, #tpu.memory_space<vmem>>) attributes {dimension_semantics = [#tpu.dimension_semantics<parallel>], iteration_bounds = array<i64: 1>, scalar_prefetch = 0 : i64, scratch_operands = 0 : i64, tpu.core_type = #tpu.core_type<tc>, window_params = [{transform_indices = @transform_0, window_bounds = array<i64: 128, 20>}, {pipeline_mode = #tpu.pipeline_mode<synchronous>, transform_indices = @transform_1, window_bounds = array<i64: 20, 128>}, {pipeline_mode = #tpu.pipeline_mode<synchronous>, transform_indices = @transform_2, window_bounds = array<i64: 1, 128>}, {pipeline_mode = #tpu.pipeline_mode<synchronous>, transform_indices = @transform_3, window_bounds = array<i64: 1, 128>}, {pipeline_mode = #tpu.pipeline_mode<synchronous>, transform_indices = @transform_4, window_bounds = array<i64: 1, 128>}, {transform_indices = @transform_5, window_bounds = array<i64: 1, 128>}]} {
    %c0 = arith.constant 0 : index
    %c0_0 = arith.constant 0 : index
    %0 = vector.load %arg1[%c0, %c0_0] : memref<128x20xf32, #tpu.memory_space<vmem>>, vector<128x20xf32>
    %1 = arith.truncf %0 : vector<128x20xf32> to vector<128x20xbf16>
    %c0_1 = arith.constant 0 : index
    %c0_2 = arith.constant 0 : index
    %2 = vector.load %arg2[%c0_1, %c0_2] : memref<20x128xbf16, #tpu.memory_space<vmem>>, vector<20x128xbf16>
    %cst = arith.constant dense<0.000000e+00> : vector<128x128xf32>
    %3 = tpu.matmul %1, %2, %cst {dimension_numbers = #tpu.dot_dimension_numbers<[1], [0], [0], [1], [0, 0, 1, 1], [], []>} : vector<128x20xbf16>, vector<20x128xbf16>, vector<128x128xf32> -> vector<128x128xf32>
    %c0_3 = arith.constant 0 : index
    %c0_4 = arith.constant 0 : index
    %4 = vector.load %arg3[%c0_3, %c0_4] : memref<1x128xf32, #tpu.memory_space<vmem>>, vector<1x128xf32>
    %5 = vector.broadcast %4 : vector<1x128xf32> to vector<128x128xf32>
    %6 = arith.addf %3, %5 : vector<128x128xf32>
    %cst_5 = arith.constant 0.000000e+00 : f32
    %7 = vector.broadcast %cst_5 : f32 to vector<128x128xf32>
    %8 = arith.maximumf %6, %7 : vector<128x128xf32>
    %c0_6 = arith.constant 0 : index
    %c0_7 = arith.constant 0 : index
    %9 = vector.load %arg4[%c0_6, %c0_7] : memref<1x128xf32, #tpu.memory_space<vmem>>, vector<1x128xf32>
    %10 = vector.broadcast %9 : vector<1x128xf32> to vector<128x128xf32>
    %11 = arith.mulf %8, %10 : vector<128x128xf32>
    %12 = vector.shape_cast %11 : vector<128x128xf32> to vector<1x128x128xf32>
    %cst_8 = arith.constant dense<0.000000e+00> : vector<1x128xf32>
    %13 = vector.multi_reduction <add>, %12, %cst_8 [2] : vector<1x128x128xf32> to vector<1x128xf32>
    %c0_9 = arith.constant 0 : index
    %c0_10 = arith.constant 0 : index
    %14 = vector.load %arg5[%c0_9, %c0_10] : memref<1x128xf32, #tpu.memory_space<vmem>>, vector<1x128xf32>
    %15 = arith.addf %13, %14 : vector<1x128xf32>
    %16 = arith.negf %15 : vector<1x128xf32>
    %17 = math.exp %16 : vector<1x128xf32>
    %cst_11 = arith.constant 1.000000e+00 : f32
    %18 = vector.broadcast %cst_11 : f32 to vector<1x128xf32>
    %19 = arith.addf %18, %17 : vector<1x128xf32>
    %20 = arith.divf %18, %19 : vector<1x128xf32>
    %c0_12 = arith.constant 0 : index
    %c0_13 = arith.constant 0 : index
    %21 = vector.load %arg6[%c0_12, %c0_13] : memref<1x128xf32, #tpu.memory_space<vmem>>, vector<1x128xf32>
    tpu.vector_store %arg6[%c0_12, %c0_13], %20 {strides = array<i32>} : memref<1x128xf32, #tpu.memory_space<vmem>>, vector<1x128xf32>,
    return
  }
  func.func @transform_0(%arg0: i32) -> (i32, i32) {
    %c0_i32 = arith.constant 0 : i32
    %c0_i32_0 = arith.constant 0 : i32
    return %arg0, %c0_i32 : i32, i32
  }
  func.func @transform_1(%arg0: i32) -> (i32, i32) {
    %c0_i32 = arith.constant 0 : i32
    %c0_i32_0 = arith.constant 0 : i32
    %c0_i32_1 = arith.constant 0 : i32
    return %c0_i32, %c0_i32_0 : i32, i32
  }
  func.func @transform_2(%arg0: i32) -> (i32, i32) {
    %c0_i32 = arith.constant 0 : i32
    %c0_i32_0 = arith.constant 0 : i32
    %c0_i32_1 = arith.constant 0 : i32
    return %c0_i32, %c0_i32_0 : i32, i32
  }
  func.func @transform_3(%arg0: i32) -> (i32, i32) {
    %c0_i32 = arith.constant 0 : i32
    %c0_i32_0 = arith.constant 0 : i32
    %c0_i32_1 = arith.constant 0 : i32
    return %c0_i32, %c0_i32_0 : i32, i32
  }
  func.func @transform_4(%arg0: i32) -> (i32, i32) {
    %c0_i32 = arith.constant 0 : i32
    %c0_i32_0 = arith.constant 0 : i32
    %c0_i32_1 = arith.constant 0 : i32
    return %c0_i32, %c0_i32_0 : i32, i32
  }
  func.func @transform_5(%arg0: i32) -> (i32, i32) {
    %c0_i32 = arith.constant 0 : i32
    %c0_i32_0 = arith.constant 0 : i32
    return %arg0, %c0_i32 : i32, i32
  }
}

</mosaic_0001>

<llo_original>
// kernel: tpu_custom_call.1
$region0: #{tpu_custom_call.1}
  #allocation0 [shape = 'u32[]', space=smem, size = 0x4, offset = 0x4, fixed_abs, tag = 'smem constant byte address 0x4 - core index']
  #allocation1 [shape = 'u32[144,128]{1,0:T(1,128)}', space=vmem, size = 0x12000, scoped, tag = 'internal scratch']
  %s0 = inlined_call_operand.vmem [shape: f32[128,20], index: 0, kind: input, shape index: {}]
  %s1 = inlined_call_operand.vmem [shape: bf16[20,128], index: 1, kind: input, shape index: {}]
  %s2 = inlined_call_operand.vmem [shape: f32[1,128], index: 2, kind: input, shape index: {}]
  %s3 = inlined_call_operand.vmem [shape: f32[1,128], index: 3, kind: input, shape index: {}]
  %s4 = inlined_call_operand.vmem [shape: f32[1,128], index: 4, kind: input, shape index: {}]
  %s5 = inlined_call_operand.hbm [shape: f32[1,128], index: 5, kind: output, shape index: {}]
  %s6 = sld [smem:[#allocation0]]
  $region30: #{tpu_custom_call.1} parent=0
    _
  %s8 = ssub.s32 1, %s6
  %s9 = scalar_select 0, %s8, %s6
  $region1: #{tpu_custom_call.1} parent=0
    #allocation2 [shape = 'u8[512]{0}', space=vmem, size = 0x400, scoped, tag = 'output window, operand 0, single buffered']
    #allocation3 [shape = 's32[1]{0}', space=sflag, size = 0x4, scoped, tag = 'scoped memory for tpu_custom_call.1']
    %10 = vsyncpa [#allocation3], 0
    // Predicated region
    $region2: #{tpu_custom_call.1} parent=1 // pred_check
      _
    $region3: #{tpu_custom_call.1} parent=1 // pred_check_branch
      %12 = sbr.rel (0) target = $region5
    $region4: #{tpu_custom_call.1} parent=1 // pred_region
      _
    $region5: #{tpu_custom_call.1} parent=1 // pred_fallthru
      _
    // Predicated region
    $region6: #{tpu_custom_call.1} parent=1 // pred_check
      _
    $region7: #{tpu_custom_call.1} parent=1 // pred_check_branch
      %14 = sbr.rel (0) target = $region9
    $region8: #{tpu_custom_call.1} parent=1 // pred_region
      _
    $region9: #{tpu_custom_call.1} parent=1 // pred_fallthru
      _
    // Predicated region
    $region10: #{tpu_custom_call.1} parent=1 // pred_check
      _
    $region11: #{tpu_custom_call.1} parent=1 // pred_check_branch
      %16 = sbr.rel (0) target = $region13
    $region12: #{tpu_custom_call.1} parent=1 // pred_region
      _
    $region13: #{tpu_custom_call.1} parent=1 // pred_fallthru
      _
    // Predicated region
    $region14: #{tpu_custom_call.1} parent=1 // pred_check
      _
    $region15: #{tpu_custom_call.1} parent=1 // pred_check_branch
      %18 = sbr.rel (0) target = $region17
    $region16: #{tpu_custom_call.1} parent=1 // pred_region
      _
    $region17: #{tpu_custom_call.1} parent=1 // pred_fallthru
      _
    // Predicated region
    $region18: #{tpu_custom_call.1} parent=1 // pred_check
      _
    $region19: #{tpu_custom_call.1} parent=1 // pred_check_branch
      %20 = sbr.rel (0) target = $region21
    $region20: #{tpu_custom_call.1} parent=1 // pred_region
      _
    $region21: #{tpu_custom_call.1} parent=1 // pred_fallthru
      _
    %v22 = vld [vmem:[%s0] sm:$0xff]
    %v23 = vld [vmem:[%s0 + $0x8] sm:$0xff]
    %v24 = vld [vmem:[%s0 + $0x10] sm:$0xff]
    %v25 = vld [vmem:[%s0 + $0x18] sm:$0xff]
    %v26 = vld [vmem:[%s0 + $0x20] sm:$0xff]
    %v27 = vld [vmem:[%s0 + $0x28] sm:$0xff]
    %v28 = vld [vmem:[%s0 + $0x30] sm:$0xff]
    %v29 = vld [vmem:[%s0 + $0x38] sm:$0xff]
    %v30 = vld [vmem:[%s0 + $0x40] sm:$0xff]
    %v31 = vld [vmem:[%s0 + $0x48] sm:$0xff]
    %v32 = vld [vmem:[%s0 + $0x50] sm:$0xff]
    %v33 = vld [vmem:[%s0 + $0x58] sm:$0xff]
    %v34 = vld [vmem:[%s0 + $0x60] sm:$0xff]
    %v35 = vld [vmem:[%s0 + $0x68] sm:$0xff]
    %v36 = vld [vmem:[%s0 + $0x70] sm:$0xff]
    %v37 = vld [vmem:[%s0 + $0x78] sm:$0xff]
    %v38 = vpack.c.bf16 %v23, %v22
    %v39 = vpack.c.bf16 %v25, %v24
    %v40 = vpack.c.bf16 %v27, %v26
    %v41 = vpack.c.bf16 %v29, %v28
    %v42 = vpack.c.bf16 %v31, %v30
    %v43 = vpack.c.bf16 %v33, %v32
    %v44 = vpack.c.bf16 %v35, %v34
    %v45 = vpack.c.bf16 %v37, %v36
    %v46 = vld [vmem:[%s1] sm:$0xf]
    %v47 = vld [vmem:[%s1 + $0x4] sm:$0xf]
    %v48 = vld [vmem:[%s1 + $0x8] sm:$0x3]
    %v49 = vld [vmem:[%s2] sm:$0x1]
    %v51 = vlaneseq
    %v52 = vshrl.u32 %v51, 7
    %v53 = vsub.s32 0, %v52
    %v54 = vrot.slane %v49, %v53
    %v59 = vunpack.c.l.b16 %v46
    %v60 = vunpack.c.l.b16 %v47
    %v61 = vunpack.c.l.b16 %v48
    %v62 = vpack.c.b16 %v60, %v59
    %v63 = vpack.c.b16 %v61, %v61
    %vm65 = vcmask 162816
    %v67 = vsel %vm65, %v38, 0
    %v70 = vsel %vm65, %v39, 0
    %v73 = vsel %vm65, %v40, 0
    %v76 = vsel %vm65, %v41, 0
    %v79 = vsel %vm65, %v42, 0
    %v82 = vsel %vm65, %v43, 0
    %v85 = vsel %vm65, %v44, 0
    %v88 = vsel %vm65, %v45, 0
    %vm90 = vcmask 1041408
    %v92 = vsel %vm90, %v63, 0
    %94 = vmatprep.subr.bf16.mxu0 0
    %95 = vmatpush1.bf16.msra.mxu0 %v62
    %96 = vmatprep.subr.bf16.mxu0 0
    %97 = vmatpush1.bf16.msra.mxu0 %v92
    %98 = vmatprep.subr.bf16.mxu0 0
    %99 = vmatpush1.bf16.msra.mxu0 0
    %100 = vmatprep.subr.bf16.mxu0 0
    %101 = vmatpush1.bf16.msra.mxu0 0
    %102 = vmatprep.subr.bf16.mxu0 0
    %103 = vmatpush1.bf16.msra.mxu0 0
    %104 = vmatprep.subr.bf16.mxu0 0
    %105 = vmatpush1.bf16.msra.mxu0 0
    %106 = vmatprep.subr.bf16.mxu0 0
    %107 = vmatpush1.bf16.msra.mxu0 0
    %108 = vmatprep.subr.bf16.mxu0 0
    %109 = vmatpush1.bf16.msra.mxu0 0
    %110 = vmatprep.subr.bf16.mxu0 0
    %111 = vmatpush1.bf16.msra.mxu0 0
    %112 = vmatprep.subr.bf16.mxu0 0
    %113 = vmatpush1.bf16.msra.mxu0 0
    %114 = vmatprep.subr.bf16.mxu0 0
    %115 = vmatpush1.bf16.msra.mxu0 0
    %116 = vmatprep.subr.bf16.mxu0 0
    %117 = vmatpush1.bf16.msra.mxu0 0
    %118 = vmatprep.subr.bf16.mxu0 0
    %119 = vmatpush1.bf16.msra.mxu0 0
    %120 = vmatprep.subr.bf16.mxu0 0
    %121 = vmatpush1.bf16.msra.mxu0 0
    %122 = vmatprep.subr.bf16.mxu0 0
    %123 = vmatpush1.bf16.msra.mxu0 0
    %124 = vmatprep.subr.bf16.mxu0 0
    %125 = vmatpush1.bf16.msra.mxu0 0
    %126 = vmatprep.mubr.bf16.mxu0 0
    %127 = vmatmul.mubr.bf16.gmra.mrb[0].mxu0 %v67
    %v128 = vpop.f32.mrb[0].mxu0
    %v129 = vadd.f32 %v54, %v128
    %v130 = vpop.f32.mrb[0].mxu0
    %v131 = vpop.f32.mrb[0].mxu0
    %v132 = vadd.f32 %v54, %v131
    %v133 = vpop.f32.mrb[0].mxu0
    %134 = vmatprep.mubr.bf16.mxu0 0
    %135 = vmatmul.mubr.bf16.gmra.mrb[0].mxu0 %v70
    %v136 = vpop.f32.mrb[0].mxu0
    %v137 = vadd.f32 %v54, %v136
    %v138 = vpop.f32.mrb[0].mxu0
    %v139 = vpop.f32.mrb[0].mxu0
    %v140 = vadd.f32 %v54, %v139
    %v141 = vpop.f32.mrb[0].mxu0
    %142 = vmatprep.mubr.bf16.mxu0 0
    %143 = vmatmul.mubr.bf16.gmra.mrb[0].mxu0 %v73
    %v144 = vpop.f32.mrb[0].mxu0
    %v145 = vadd.f32 %v54, %v144
    %v146 = vpop.f32.mrb[0].mxu0
    %v147 = vpop.f32.mrb[0].mxu0
    %v148 = vadd.f32 %v54, %v147
    %v149 = vpop.f32.mrb[0].mxu0
    %150 = vmatprep.mubr.bf16.mxu0 0
    %151 = vmatmul.mubr.bf16.gmra.mrb[0].mxu0 %v76
    %v152 = vpop.f32.mrb[0].mxu0
    %v153 = vadd.f32 %v54, %v152
    %v154 = vpop.f32.mrb[0].mxu0
    %v155 = vpop.f32.mrb[0].mxu0
    %v156 = vadd.f32 %v54, %v155
    %v157 = vpop.f32.mrb[0].mxu0
    %158 = vmatprep.mubr.bf16.mxu0 0
    %159 = vmatmul.mubr.bf16.gmra.mrb[0].mxu0 %v79
    %v160 = vpop.f32.mrb[0].mxu0
    %v161 = vadd.f32 %v54, %v160
    %v162 = vpop.f32.mrb[0].mxu0
    %v163 = vpop.f32.mrb[0].mxu0
    %v164 = vadd.f32 %v54, %v163
    %v165 = vpop.f32.mrb[0].mxu0
    %166 = vmatprep.mubr.bf16.mxu0 0
    %167 = vmatmul.mubr.bf16.gmra.mrb[0].mxu0 %v82
    %v168 = vpop.f32.mrb[0].mxu0
    %v169 = vadd.f32 %v54, %v168
    %v170 = vpop.f32.mrb[0].mxu0
    %v171 = vpop.f32.mrb[0].mxu0
    %v172 = vadd.f32 %v54, %v171
    %v173 = vpop.f32.mrb[0].mxu0
    %174 = vmatprep.mubr.bf16.mxu0 0
    %175 = vmatmul.mubr.bf16.gmra.mrb[0].mxu0 %v85
    %v176 = vpop.f32.mrb[0].mxu0
    %v177 = vadd.f32 %v54, %v176
    %v178 = vpop.f32.mrb[0].mxu0
    %v179 = vpop.f32.mrb[0].mxu0
    %v180 = vadd.f32 %v54, %v179
    %v181 = vpop.f32.mrb[0].mxu0
    %182 = vmatprep.mubr.bf16.mxu0 0
    %183 = vmatmul.mubr.bf16.gmra.mrb[0].mxu0 %v88
    %v184 = vpop.f32.mrb[0].mxu0
    %v185 = vadd.f32 %v54, %v184
    %v186 = vpop.f32.mrb[0].mxu0
    %v187 = vpop.f32.mrb[0].mxu0
    %v188 = vadd.f32 %v54, %v187
    %v189 = vpop.f32.mrb[0].mxu0
    %190 = vdwg.mxu0
    %v191 = vmax.f32 %v129, 0.0
    %v192 = vmax.f32 %v132, 0.0
    %v193 = vmax.f32 %v137, 0.0
    %v194 = vmax.f32 %v140, 0.0
    %v195 = vmax.f32 %v145, 0.0
    %v196 = vmax.f32 %v148, 0.0
    %v197 = vmax.f32 %v153, 0.0
    %v198 = vmax.f32 %v156, 0.0
    %v199 = vmax.f32 %v161, 0.0
    %v200 = vmax.f32 %v164, 0.0
    %v201 = vmax.f32 %v169, 0.0
    %v202 = vmax.f32 %v172, 0.0
    %v203 = vmax.f32 %v177, 0.0
    %v204 = vmax.f32 %v180, 0.0
    %v205 = vmax.f32 %v185, 0.0
    %v206 = vmax.f32 %v188, 0.0
    %v207 = vld [vmem:[%s3] sm:$0x1]
    %v209 = vlaneseq
    %v210 = vshrl.u32 %v209, 7
    %v211 = vsub.s32 0, %v210
    %v212 = vrot.slane %v207, %v211
    %v214 = vmul.f32 %v191, %v212
    %v215 = vmul.f32 %v192, %v212
    %v216 = vmul.f32 %v193, %v212
    %v217 = vmul.f32 %v194, %v212
    %v218 = vmul.f32 %v195, %v212
    %v219 = vmul.f32 %v196, %v212
    %v220 = vmul.f32 %v197, %v212
    %v221 = vmul.f32 %v198, %v212
    %v222 = vmul.f32 %v199, %v212
    %v223 = vmul.f32 %v200, %v212
    %v224 = vmul.f32 %v201, %v212
    %v225 = vmul.f32 %v202, %v212
    %v226 = vmul.f32 %v203, %v212
    %v227 = vmul.f32 %v204, %v212
    %v228 = vmul.f32 %v205, %v212
    %v229 = vmul.f32 %v206, %v212
    %230 = vadd.xlane.f32.xlu0 %v214
    %v231 = vpop.xlane.xlu0 %230
    %232 = vadd.xlane.f32.xlu0 %v215
    %v233 = vpop.xlane.xlu0 %232
    %234 = vadd.xlane.f32.xlu0 %v216
    %v235 = vpop.xlane.xlu0 %234
    %236 = vadd.xlane.f32.xlu0 %v217
    %v237 = vpop.xlane.xlu0 %236
    %238 = vadd.xlane.f32.xlu0 %v218
    %v239 = vpop.xlane.xlu0 %238
    %240 = vadd.xlane.f32.xlu0 %v219
    %v241 = vpop.xlane.xlu0 %240
    %242 = vadd.xlane.f32.xlu0 %v220
    %v243 = vpop.xlane.xlu0 %242
    %244 = vadd.xlane.f32.xlu0 %v221
    %v245 = vpop.xlane.xlu0 %244
    %246 = vadd.xlane.f32.xlu0 %v222
    %v247 = vpop.xlane.xlu0 %246
    %248 = vadd.xlane.f32.xlu0 %v223
    %v249 = vpop.xlane.xlu0 %248
    %250 = vadd.xlane.f32.xlu0 %v224
    %v251 = vpop.xlane.xlu0 %250
    %252 = vadd.xlane.f32.xlu0 %v225
    %v253 = vpop.xlane.xlu0 %252
    %254 = vadd.xlane.f32.xlu0 %v226
    %v255 = vpop.xlane.xlu0 %254
    %256 = vadd.xlane.f32.xlu0 %v227
    %v257 = vpop.xlane.xlu0 %256
    %258 = vadd.xlane.f32.xlu0 %v228
    %v259 = vpop.xlane.xlu0 %258
    %260 = vadd.xlane.f32.xlu0 %v229
    %v261 = vpop.xlane.xlu0 %260
    %v262 = vld [vmem:[%s4] sm:$0x1]
    %v264 = vlaneseq
    %v265 = vshrl.u32 %v264, 7
    %v266 = vsub.s32 0, %v265
    %v267 = vrot.slane %v262, %v266
    %269 = vbcast.lane.b32.xlu0 %v267, 256
    %v270 = vpop.permute.xlu0 %269
    %s272 = sor.u32 256, 8
    %273 = vbcast.lane.b32.xlu0 %v267, %s272
    %v274 = vpop.permute.xlu0 %273
    %s276 = sor.u32 256, 16
    %277 = vbcast.lane.b32.xlu0 %v267, %s276
    %v278 = vpop.permute.xlu0 %277
    %s280 = sor.u32 256, 24
    %281 = vbcast.lane.b32.xlu0 %v267, %s280
    %v282 = vpop.permute.xlu0 %281
    %s284 = sor.u32 256, 32
    %285 = vbcast.lane.b32.xlu0 %v267, %s284
    %v286 = vpop.permute.xlu0 %285
    %s288 = sor.u32 256, 40
    %289 = vbcast.lane.b32.xlu0 %v267, %s288
    %v290 = vpop.permute.xlu0 %289
    %s292 = sor.u32 256, 48
    %293 = vbcast.lane.b32.xlu0 %v267, %s292
    %v294 = vpop.permute.xlu0 %293
    %s296 = sor.u32 256, 56
    %297 = vbcast.lane.b32.xlu0 %v267, %s296
    %v298 = vpop.permute.xlu0 %297
    %s300 = sor.u32 256, 64
    %301 = vbcast.lane.b32.xlu0 %v267, %s300
    %v302 = vpop.permute.xlu0 %301
    %s304 = sor.u32 256, 72
    %305 = vbcast.lane.b32.xlu0 %v267, %s304
    %v306 = vpop.permute.xlu0 %305
    %s308 = sor.u32 256, 80
    %309 = vbcast.lane.b32.xlu0 %v267, %s308
    %v310 = vpop.permute.xlu0 %309
    %s312 = sor.u32 256, 88
    %313 = vbcast.lane.b32.xlu0 %v267, %s312
    %v314 = vpop.permute.xlu0 %313
    %s316 = sor.u32 256, 96
    %317 = vbcast.lane.b32.xlu0 %v267, %s316
    %v318 = vpop.permute.xlu0 %317
    %s320 = sor.u32 256, 104
    %321 = vbcast.lane.b32.xlu0 %v267, %s320
    %v322 = vpop.permute.xlu0 %321
    %s324 = sor.u32 256, 112
    %325 = vbcast.lane.b32.xlu0 %v267, %s324
    %v326 = vpop.permute.xlu0 %325
    %s328 = sor.u32 256, 120
    %329 = vbcast.lane.b32.xlu0 %v267, %s328
    %v330 = vpop.permute.xlu0 %329
    %v347 = vadd.f32 %v231, %v270
    %v348 = vadd.f32 %v233, %v274
    %v349 = vadd.f32 %v235, %v278
    %v350 = vadd.f32 %v237, %v282
    %v351 = vadd.f32 %v239, %v286
    %v352 = vadd.f32 %v241, %v290
    %v353 = vadd.f32 %v243, %v294
    %v354 = vadd.f32 %v245, %v298
    %v355 = vadd.f32 %v247, %v302
    %v356 = vadd.f32 %v249, %v306
    %v357 = vadd.f32 %v251, %v310
    %v358 = vadd.f32 %v253, %v314
    %v359 = vadd.f32 %v255, %v318
    %v360 = vadd.f32 %v257, %v322
    %v361 = vadd.f32 %v259, %v326
    %v362 = vadd.f32 %v261, %v330
    %v363 = vxor.u32 %v347, 2147483648
    %v364 = vxor.u32 %v348, 2147483648
    %v365 = vxor.u32 %v349, 2147483648
    %v366 = vxor.u32 %v350, 2147483648
    %v367 = vxor.u32 %v351, 2147483648
    %v368 = vxor.u32 %v352, 2147483648
    %v369 = vxor.u32 %v353, 2147483648
    %v370 = vxor.u32 %v354, 2147483648
    %v371 = vxor.u32 %v355, 2147483648
    %v372 = vxor.u32 %v356, 2147483648
    %v373 = vxor.u32 %v357, 2147483648
    %v374 = vxor.u32 %v358, 2147483648
    %v375 = vxor.u32 %v359, 2147483648
    %v376 = vxor.u32 %v360, 2147483648
    %v377 = vxor.u32 %v361, 2147483648
    %v378 = vxor.u32 %v362, 2147483648
    %v379 = vmul.f32 %v363, 1.442695
    %v380 = vpow.pop %v379
    %v381 = vmul.f32 %v364, 1.442695
    %v382 = vpow.pop %v381
    %v383 = vmul.f32 %v365, 1.442695
    %v384 = vpow.pop %v383
    %v385 = vmul.f32 %v366, 1.442695
    %v386 = vpow.pop %v385
    %v387 = vmul.f32 %v367, 1.442695
    %v388 = vpow.pop %v387
    %v389 = vmul.f32 %v368, 1.442695
    %v390 = vpow.pop %v389
    %v391 = vmul.f32 %v369, 1.442695
    %v392 = vpow.pop %v391
    %v393 = vmul.f32 %v370, 1.442695
    %v394 = vpow.pop %v393
    %v395 = vmul.f32 %v371, 1.442695
    %v396 = vpow.pop %v395
    %v397 = vmul.f32 %v372, 1.442695
    %v398 = vpow.pop %v397
    %v399 = vmul.f32 %v373, 1.442695
    %v400 = vpow.pop %v399
    %v401 = vmul.f32 %v374, 1.442695
    %v402 = vpow.pop %v401
    %v403 = vmul.f32 %v375, 1.442695
    %v404 = vpow.pop %v403
    %v405 = vmul.f32 %v376, 1.442695
    %v406 = vpow.pop %v405
    %v407 = vmul.f32 %v377, 1.442695
    %v408 = vpow.pop %v407
    %v409 = vmul.f32 %v378, 1.442695
    %v410 = vpow.pop %v409
    %v411 = vadd.f32 %v380, 1.0
    %v412 = vadd.f32 %v382, 1.0
    %v413 = vadd.f32 %v384, 1.0
    %v414 = vadd.f32 %v386, 1.0
    %v415 = vadd.f32 %v388, 1.0
    %v416 = vadd.f32 %v390, 1.0
    %v417 = vadd.f32 %v392, 1.0
    %v418 = vadd.f32 %v394, 1.0
    %v419 = vadd.f32 %v396, 1.0
    %v420 = vadd.f32 %v398, 1.0
    %v421 = vadd.f32 %v400, 1.0
    %v422 = vadd.f32 %v402, 1.0
    %v423 = vadd.f32 %v404, 1.0
    %v424 = vadd.f32 %v406, 1.0
    %v425 = vadd.f32 %v408, 1.0
    %v426 = vadd.f32 %v410, 1.0
    %v427 = vrcp.pop %v411
    %v428 = vmul.f32 1.0, %v427
    %v429 = vrcp.pop %v412
    %v430 = vmul.f32 1.0, %v429
    %v431 = vrcp.pop %v413
    %v432 = vmul.f32 1.0, %v431
    %v433 = vrcp.pop %v414
    %v434 = vmul.f32 1.0, %v433
    %v435 = vrcp.pop %v415
    %v436 = vmul.f32 1.0, %v435
    %v437 = vrcp.pop %v416
    %v438 = vmul.f32 1.0, %v437
    %v439 = vrcp.pop %v417
    %v440 = vmul.f32 1.0, %v439
    %v441 = vrcp.pop %v418
    %v442 = vmul.f32 1.0, %v441
    %v443 = vrcp.pop %v419
    %v444 = vmul.f32 1.0, %v443
    %v445 = vrcp.pop %v420
    %v446 = vmul.f32 1.0, %v445
    %v447 = vrcp.pop %v421
    %v448 = vmul.f32 1.0, %v447
    %v449 = vrcp.pop %v422
    %v450 = vmul.f32 1.0, %v449
    %v451 = vrcp.pop %v423
    %v452 = vmul.f32 1.0, %v451
    %v453 = vrcp.pop %v424
    %v454 = vmul.f32 1.0, %v453
    %v455 = vrcp.pop %v425
    %v456 = vmul.f32 1.0, %v455
    %v457 = vrcp.pop %v426
    %v458 = vmul.f32 1.0, %v457
    %475 = vset.pattern.permute.xlu0 0
    %476 = vperm.xlu0 %475, %v428
    %v477 = vpop.permute.xlu0 %476
    %478 = vset.pattern.permute.xlu0 0
    %479 = vperm.xlu0 %478, %v430
    %v480 = vpop.permute.xlu0 %479
    %481 = vset.pattern.permute.xlu0 0
    %482 = vperm.xlu0 %481, %v432
    %v483 = vpop.permute.xlu0 %482
    %484 = vset.pattern.permute.xlu0 0
    %485 = vperm.xlu0 %484, %v434
    %v486 = vpop.permute.xlu0 %485
    %487 = vset.pattern.permute.xlu0 0
    %488 = vperm.xlu0 %487, %v436
    %v489 = vpop.permute.xlu0 %488
    %490 = vset.pattern.permute.xlu0 0
    %491 = vperm.xlu0 %490, %v438
    %v492 = vpop.permute.xlu0 %491
    %493 = vset.pattern.permute.xlu0 0
    %494 = vperm.xlu0 %493, %v440
    %v495 = vpop.permute.xlu0 %494
    %496 = vset.pattern.permute.xlu0 0
    %497 = vperm.xlu0 %496, %v442
    %v498 = vpop.permute.xlu0 %497
    %499 = vset.pattern.permute.xlu0 0
    %500 = vperm.xlu0 %499, %v444
    %v501 = vpop.permute.xlu0 %500
    %502 = vset.pattern.permute.xlu0 0
    %503 = vperm.xlu0 %502, %v446
    %v504 = vpop.permute.xlu0 %503
    %505 = vset.pattern.permute.xlu0 0
    %506 = vperm.xlu0 %505, %v448
    %v507 = vpop.permute.xlu0 %506
    %508 = vset.pattern.permute.xlu0 0
    %509 = vperm.xlu0 %508, %v450
    %v510 = vpop.permute.xlu0 %509
    %511 = vset.pattern.permute.xlu0 0
    %512 = vperm.xlu0 %511, %v452
    %v513 = vpop.permute.xlu0 %512
    %514 = vset.pattern.permute.xlu0 0
    %515 = vperm.xlu0 %514, %v454
    %v516 = vpop.permute.xlu0 %515
    %517 = vset.pattern.permute.xlu0 0
    %518 = vperm.xlu0 %517, %v456
    %v519 = vpop.permute.xlu0 %518
    %520 = vset.pattern.permute.xlu0 0
    %521 = vperm.xlu0 %520, %v458
    %v522 = vpop.permute.xlu0 %521
    %v523 = vlaneseq
    %v524 = vand.u32 %v523, 127
    %v525 = vlaneseq
    %v526 = vshrl.u32 %v525, 7
    %v527 = vsub.s32 %v524, %v526
    %v528 = vrot.slane %v477, %v527
    %v529 = vadd.s32 %v524, 4294967288
    %v530 = vlaneseq
    %v531 = vshrl.u32 %v530, 7
    %v532 = vsub.s32 %v529, %v531
    %v533 = vrot.slane %v480, %v532
    %vm534 = vcmask 130112
    %v535 = vsel %vm534, %v533, %v528
    %v536 = vadd.s32 %v524, 4294967280
    %v537 = vlaneseq
    %v538 = vshrl.u32 %v537, 7
    %v539 = vsub.s32 %v536, %v538
    %v540 = vrot.slane %v483, %v539
    %vm541 = vcmask 195712
    %v542 = vsel %vm541, %v540, %v535
    %v543 = vadd.s32 %v524, 4294967272
    %v544 = vlaneseq
    %v545 = vshrl.u32 %v544, 7
    %v546 = vsub.s32 %v543, %v545
    %v547 = vrot.slane %v486, %v546
    %vm548 = vcmask 261312
    %v549 = vsel %vm548, %v547, %v542
    %v550 = vadd.s32 %v524, 4294967264
    %v551 = vlaneseq
    %v552 = vshrl.u32 %v551, 7
    %v553 = vsub.s32 %v550, %v552
    %v554 = vrot.slane %v489, %v553
    %vm555 = vcmask 326912
    %v556 = vsel %vm555, %v554, %v549
    %v557 = vadd.s32 %v524, 4294967256
    %v558 = vlaneseq
    %v559 = vshrl.u32 %v558, 7
    %v560 = vsub.s32 %v557, %v559
    %v561 = vrot.slane %v492, %v560
    %vm562 = vcmask 392512
    %v563 = vsel %vm562, %v561, %v556
    %v564 = vadd.s32 %v524, 4294967248
    %v565 = vlaneseq
    %v566 = vshrl.u32 %v565, 7
    %v567 = vsub.s32 %v564, %v566
    %v568 = vrot.slane %v495, %v567
    %vm569 = vcmask 458112
    %v570 = vsel %vm569, %v568, %v563
    %v571 = vadd.s32 %v524, 4294967240
    %v572 = vlaneseq
    %v573 = vshrl.u32 %v572, 7
    %v574 = vsub.s32 %v571, %v573
    %v575 = vrot.slane %v498, %v574
    %vm576 = vcmask 523712
    %v577 = vsel %vm576, %v575, %v570
    %v578 = vadd.s32 %v524, 4294967232
    %v579 = vlaneseq
    %v580 = vshrl.u32 %v579, 7
    %v581 = vsub.s32 %v578, %v580
    %v582 = vrot.slane %v501, %v581
    %vm583 = vcmask 589312
    %v584 = vsel %vm583, %v582, %v577
    %v585 = vadd.s32 %v524, 4294967224
    %v586 = vlaneseq
    %v587 = vshrl.u32 %v586, 7
    %v588 = vsub.s32 %v585, %v587
    %v589 = vrot.slane %v504, %v588
    %vm590 = vcmask 654912
    %v591 = vsel %vm590, %v589, %v584
    %v592 = vadd.s32 %v524, 4294967216
    %v593 = vlaneseq
    %v594 = vshrl.u32 %v593, 7
    %v595 = vsub.s32 %v592, %v594
    %v596 = vrot.slane %v507, %v595
    %vm597 = vcmask 720512
    %v598 = vsel %vm597, %v596, %v591
    %v599 = vadd.s32 %v524, 4294967208
    %v600 = vlaneseq
    %v601 = vshrl.u32 %v600, 7
    %v602 = vsub.s32 %v599, %v601
    %v603 = vrot.slane %v510, %v602
    %vm604 = vcmask 786112
    %v605 = vsel %vm604, %v603, %v598
    %v606 = vadd.s32 %v524, 4294967200
    %v607 = vlaneseq
    %v608 = vshrl.u32 %v607, 7
    %v609 = vsub.s32 %v606, %v608
    %v610 = vrot.slane %v513, %v609
    %vm611 = vcmask 851712
    %v612 = vsel %vm611, %v610, %v605
    %v613 = vadd.s32 %v524, 4294967192
    %v614 = vlaneseq
    %v615 = vshrl.u32 %v614, 7
    %v616 = vsub.s32 %v613, %v615
    %v617 = vrot.slane %v516, %v616
    %vm618 = vcmask 917312
    %v619 = vsel %vm618, %v617, %v612
    %v620 = vadd.s32 %v524, 4294967184
    %v621 = vlaneseq
    %v622 = vshrl.u32 %v621, 7
    %v623 = vsub.s32 %v620, %v622
    %v624 = vrot.slane %v519, %v623
    %vm625 = vcmask 982912
    %v626 = vsel %vm625, %v624, %v619
    %v627 = vadd.s32 %v524, 4294967176
    %v628 = vlaneseq
    %v629 = vshrl.u32 %v628, 7
    %v630 = vsub.s32 %v627, %v629
    %v631 = vrot.slane %v522, %v630
    %vm632 = vcmask 1048512
    %v633 = vsel %vm632, %v631, %v626
    %635 = vst [vmem:[#allocation2] sm:$0x1] %v633
    // Predicated region
    $region22: #{tpu_custom_call.1} parent=1 // pred_check
      _
    $region23: #{tpu_custom_call.1} parent=1 // pred_check_branch
      %637 = sbr.rel (0) target = $region25
    $region24: #{tpu_custom_call.1} parent=1 // pred_region
      %s639 = ssub.s32 16, 16
      %640 = vsyncadd [#allocation3], %s639
      %s642 = sshll.u32 [#allocation2], 4
      %s643 = int_to_ptr.vmem [resolvable:$true] %s642
      %645 = dma.vmem_to_hbm [thread:$0]  %s643, 16, %s5, [#allocation3]
    $region25: #{tpu_custom_call.1} parent=1 // pred_fallthru
      _
    // Predicated region
    $region26: #{tpu_custom_call.1} parent=1 // pred_check
      _
    $region27: #{tpu_custom_call.1} parent=1 // pred_check_branch
      %647 = sbr.rel (0) target = $region29
    $region28: #{tpu_custom_call.1} parent=1 // pred_region
      %648 = dma.done [#allocation3], 16
    $region29: #{tpu_custom_call.1} parent=1 // pred_fallthru
      _
    %649 = vsyncpa [#allocation3], 1

</llo_original>
